<compile_context>
chip_gen: v5e
topology: v5e:2x2
jax: 0.10.0
libtpu: 0.0.40
codegen_flags: <defaults>
</compile_context>

<pallas_src>
import functools

import jax
import jax.numpy as jnp
from jax.experimental import pallas as pl
from jax.experimental.pallas import tpu as pltpu


def _conv_layer_norm_kernel(x_ref, gamma_ref, beta_ref, o_ref, *, eps, inv_c):
    # x_ref block: (1, C, tT); gamma/beta blocks: (C, 1)
    x = x_ref[0].astype(jnp.float32)                       # (C, tT)

    # One pass over the tile for the statistics.
    s1 = jnp.sum(x, axis=0, keepdims=True)                 # (1, tT)
    s2 = jnp.sum(x * x, axis=0, keepdims=True)             # (1, tT)
    mean = s1 * inv_c
    var = s2 * inv_c - mean * mean                         # biased (1/C), as in the module
    rstd = jax.lax.rsqrt(var + eps)                        # EUP slot

    # Fused normalize + affine: y = x*(gamma*rstd) + (beta - mean*gamma*rstd)
    scale = gamma_ref[...] * rstd                          # (C,1)*(1,tT) -> (C, tT)
    shift = beta_ref[...] - mean * scale                   # (C, tT)
    o_ref[0] = (x * scale + shift).astype(o_ref.dtype)


def _choose_t_tile(T, target=512):
    # Full-T block when small (legal via the full-dim exemption); otherwise a
    # lane-aligned tile (multiple of 128).  Partial last blocks are masked by
    # Pallas on write and T-columns are independent, so padding is safe.
    if T <= target:
        return T
    return target


def conv_layer_norm(x, gamma, beta, eps=1e-4, t_tile=None):
    """x: [B, C, ...]; gamma, beta: [C].  LayerNorm over the channel axis."""
    orig_shape = x.shape
    B, C = orig_shape[0], orig_shape[1]
    T = 1
    for d in orig_shape[2:]:
        T *= d
    x3 = x.reshape(B, C, T)

    tT = _choose_t_tile(T) if t_tile is None else int(t_tile)
    if tT != T and tT % 128 != 0:
        raise ValueError("t_tile must be a multiple of 128 or equal to the full T")

    gamma2d = gamma.reshape(C, 1).astype(jnp.float32)
    beta2d = beta.reshape(C, 1).astype(jnp.float32)

    kernel = functools.partial(
        _conv_layer_norm_kernel, eps=float(eps), inv_c=1.0 / float(C))

    # VMEM budget: in + out blocks double-buffered, plus f32 temporaries.
    itemsize = jnp.dtype(x.dtype).itemsize
    block_bytes = C * tT * itemsize
    vmem_needed = 2 * 2 * block_bytes + 6 * C * tT * 4 + (2 << 20)
    vmem_limit = int(min(max(vmem_needed, 16 << 20), 48 << 20))

    out = pl.pallas_call(
        kernel,
        out_shape=jax.ShapeDtypeStruct((B, C, T), x.dtype),
        grid_spec=pltpu.PrefetchScalarGridSpec(
            num_scalar_prefetch=0,
            grid=(B, pl.cdiv(T, tT)),
            in_specs=[
                pl.BlockSpec((1, C, tT), lambda b, t: (b, 0, t)),
                pl.BlockSpec((C, 1), lambda b, t: (0, 0)),
                pl.BlockSpec((C, 1), lambda b, t: (0, 0)),
            ],
            out_specs=pl.BlockSpec((1, C, tT), lambda b, t: (b, 0, t)),
        ),
        compiler_params=pltpu.CompilerParams(
            dimension_semantics=("parallel", "parallel"),
            vmem_limit_bytes=vmem_limit,
        ),
    )(x3, gamma2d, beta2d)

    return out.reshape(orig_shape)


def _reference(x, gamma, beta, eps=1e-4):
    # pure-JAX reference mirroring the PyTorch forward
    mean = jnp.mean(x, axis=1, keepdims=True)
    var = jnp.mean((x - mean) ** 2, axis=1, keepdims=True)
    xn = (x - mean) * jax.lax.rsqrt(var + eps)
    shape = (1, -1) + (1,) * (x.ndim - 2)
    return xn * gamma.reshape(shape) + beta.reshape(shape)


if __name__ == "__main__":
    key = jax.random.PRNGKey(0)
    k1, k2, k3, k4 = jax.random.split(key, 4)

    # Case 1: 1-D conv layout [B, C, T], small shape -> full-T block path.
    # Params match the module's init (ones / zeros), eps matches the default 1e-4.
    B, C, T = 2, 4, 16
    x = jax.random.normal(k1, (B, C, T), dtype=jnp.float32)
    gamma = jnp.ones((C,), dtype=jnp.float32)
    beta = jnp.zeros((C,), dtype=jnp.float32)
    out = jax.block_until_ready(conv_layer_norm(x, gamma, beta, eps=1e-4))
    ref = _reference(x, gamma, beta, eps=1e-4)
    assert out.shape == x.shape
    assert jnp.allclose(out, ref, atol=1e-5, rtol=1e-5)

    # Case 2: generic [B, C, H, W] input (trailing dims flattened to T=320),
    # non-trivial affine params, tiled-T path with a masked partial last tile.
    B2, C2, H2, W2 = 2, 4, 20, 16
    x2 = jax.random.normal(k2, (B2, C2, H2, W2), dtype=jnp.float32)
    gamma2 = 1.0 + 0.1 * jax.random.normal(k3, (C2,), dtype=jnp.float32)
    beta2 = 0.1 * jax.random.normal(k4, (C2,), dtype=jnp.float32)
    out2 = jax.block_until_ready(
        conv_layer_norm(x2, gamma2, beta2, eps=1e-4, t_tile=128))
    ref2 = _reference(x2, gamma2, beta2, eps=1e-4)
    assert out2.shape == x2.shape
    assert jnp.allclose(out2, ref2, atol=1e-5, rtol=1e-5)

    print("KERNEL_OK")
</pallas_src>

<mosaic_0001>
module attributes {stable_mosaic.version = 11 : i64} {
  func.func @_conv_layer_norm_kernel(%arg0: i32, %arg1: i32, %arg2: memref<1x4x16xf32, #tpu.memory_space<vmem>>, %arg3: memref<4x1xf32, #tpu.memory_space<vmem>>, %arg4: memref<4x1xf32, #tpu.memory_space<vmem>>, %arg5: memref<1x4x16xf32, #tpu.memory_space<vmem>>) attributes {dimension_semantics = [#tpu.dimension_semantics<parallel>, #tpu.dimension_semantics<parallel>], iteration_bounds = array<i64: 2, 1>, scalar_prefetch = 0 : i64, scratch_operands = 0 : i64, tpu.core_type = #tpu.core_type<tc>, window_params = [{transform_indices = @transform_0, window_bounds = array<i64: 1, 4, 16>}, {pipeline_mode = #tpu.pipeline_mode<synchronous>, transform_indices = @transform_1, window_bounds = array<i64: 4, 1>}, {pipeline_mode = #tpu.pipeline_mode<synchronous>, transform_indices = @transform_2, window_bounds = array<i64: 4, 1>}, {transform_indices = @transform_3, window_bounds = array<i64: 1, 4, 16>}]} {
    %c0 = arith.constant 0 : index
    %c0_0 = arith.constant 0 : index
    %c0_1 = arith.constant 0 : index
    %0 = vector.load %arg2[%c0, %c0_0, %c0_1] : memref<1x4x16xf32, #tpu.memory_space<vmem>>, vector<1x4x16xf32>
    %1 = vector.shape_cast %0 : vector<1x4x16xf32> to vector<4x16xf32>
    %cst = arith.constant dense<0.000000e+00> : vector<16xf32>
    %2 = vector.multi_reduction <add>, %1, %cst [0] : vector<4x16xf32> to vector<16xf32>
    %3 = vector.shape_cast %2 : vector<16xf32> to vector<1x16xf32>
    %4 = arith.mulf %1, %1 : vector<4x16xf32>
    %cst_2 = arith.constant dense<0.000000e+00> : vector<16xf32>
    %5 = vector.multi_reduction <add>, %4, %cst_2 [0] : vector<4x16xf32> to vector<16xf32>
    %6 = vector.shape_cast %5 : vector<16xf32> to vector<1x16xf32>
    %cst_3 = arith.constant 2.500000e-01 : f32
    %7 = vector.broadcast %cst_3 : f32 to vector<1x16xf32>
    %8 = arith.mulf %3, %7 : vector<1x16xf32>
    %cst_4 = arith.constant 2.500000e-01 : f32
    %9 = vector.broadcast %cst_4 : f32 to vector<1x16xf32>
    %10 = arith.mulf %6, %9 : vector<1x16xf32>
    %11 = arith.mulf %8, %8 : vector<1x16xf32>
    %12 = arith.subf %10, %11 : vector<1x16xf32>
    %cst_5 = arith.constant 9.99999974E-5 : f32
    %13 = vector.broadcast %cst_5 : f32 to vector<1x16xf32>
    %14 = arith.addf %12, %13 : vector<1x16xf32>
    %15 = math.rsqrt %14 : vector<1x16xf32>
    %c0_6 = arith.constant 0 : index
    %c0_7 = arith.constant 0 : index
    %16 = vector.load %arg3[%c0_6, %c0_7] : memref<4x1xf32, #tpu.memory_space<vmem>>, vector<4x1xf32>
    %17 = vector.broadcast %16 : vector<4x1xf32> to vector<4x16xf32>
    %18 = vector.broadcast %15 : vector<1x16xf32> to vector<4x16xf32>
    %19 = arith.mulf %17, %18 : vector<4x16xf32>
    %c0_8 = arith.constant 0 : index
    %c0_9 = arith.constant 0 : index
    %20 = vector.load %arg4[%c0_8, %c0_9] : memref<4x1xf32, #tpu.memory_space<vmem>>, vector<4x1xf32>
    %21 = vector.broadcast %8 : vector<1x16xf32> to vector<4x16xf32>
    %22 = arith.mulf %21, %19 : vector<4x16xf32>
    %23 = vector.broadcast %20 : vector<4x1xf32> to vector<4x16xf32>
    %24 = arith.subf %23, %22 : vector<4x16xf32>
    %25 = arith.mulf %1, %19 : vector<4x16xf32>
    %26 = arith.addf %25, %24 : vector<4x16xf32>
    %c0_10 = arith.constant 0 : index
    %c0_11 = arith.constant 0 : index
    %c0_12 = arith.constant 0 : index
    %27 = vector.load %arg5[%c0_10, %c0_11, %c0_12] : memref<1x4x16xf32, #tpu.memory_space<vmem>>, vector<1x4x16xf32>
    %28 = vector.shape_cast %27 : vector<1x4x16xf32> to vector<4x16xf32>
    %29 = vector.shape_cast %26 : vector<4x16xf32> to vector<1x4x16xf32>
    tpu.vector_store %arg5[%c0_10, %c0_11, %c0_12], %29 {strides = array<i32>} : memref<1x4x16xf32, #tpu.memory_space<vmem>>, vector<1x4x16xf32>,
    return
  }
  func.func @transform_0(%arg0: i32, %arg1: i32) -> (i32, i32, i32) {
    %c0_i32 = arith.constant 0 : i32
    %c0_i32_0 = arith.constant 0 : i32
    return %arg0, %c0_i32, %arg1 : i32, i32, i32
  }
  func.func @transform_1(%arg0: i32, %arg1: i32) -> (i32, i32) {
    %c0_i32 = arith.constant 0 : i32
    %c0_i32_0 = arith.constant 0 : i32
    %c0_i32_1 = arith.constant 0 : i32
    return %c0_i32, %c0_i32_0 : i32, i32
  }
  func.func @transform_2(%arg0: i32, %arg1: i32) -> (i32, i32) {
    %c0_i32 = arith.constant 0 : i32
    %c0_i32_0 = arith.constant 0 : i32
    %c0_i32_1 = arith.constant 0 : i32
    return %c0_i32, %c0_i32_0 : i32, i32
  }
  func.func @transform_3(%arg0: i32, %arg1: i32) -> (i32, i32, i32) {
    %c0_i32 = arith.constant 0 : i32
    %c0_i32_0 = arith.constant 0 : i32
    return %arg0, %c0_i32, %arg1 : i32, i32, i32
  }
}

</mosaic_0001>

<llo_original>
// kernel: tpu_custom_call.1
$region0: #{tpu_custom_call.1}
  #allocation0 [shape = 'u32[]', space=smem, size = 0x4, offset = 0x4, fixed_abs, tag = 'smem constant byte address 0x4 - core index']
  #allocation1 [shape = 'u32[72,128]{1,0:T(1,128)}', space=vmem, size = 0x9000, scoped, tag = 'internal scratch']
  %s0 = inlined_call_operand.vmem [shape: f32[2,4,16], index: 0, kind: input, shape index: {}]
  %s1 = inlined_call_operand.vmem [shape: f32[4,1], index: 1, kind: input, shape index: {}]
  %s2 = inlined_call_operand.vmem [shape: f32[4,1], index: 2, kind: input, shape index: {}]
  %s3 = inlined_call_operand.hbm [shape: f32[2,4,16], index: 3, kind: output, shape index: {}]
  %s4 = sld [smem:[#allocation0]]
  $region45: #{tpu_custom_call.1} parent=0
    _
  %s6 = ssub.s32 1, %s4
  %s7 = scalar_select 0, %s6, %s4
  $region1: #{tpu_custom_call.1} parent=0
    #allocation2 [shape = 'u8[4096]{0}', space=vmem, size = 0x1000, scoped, tag = 'output window, operand 0']
    #allocation3 [shape = 's32[2]{0}', space=sflag, size = 0x8, scoped, tag = 'scoped memory for tpu_custom_call.1']
    %8 = vsyncpa [#allocation3], 0
    %s9 = scalar_lea.sflag [#allocation3], 1
    %10 = vsyncpa %s9, 0
    loop: start=0, step=1, limit=4
    $region2: #{tpu_custom_call.1} parent=1 // loop_pre_header
      _
    $region3: #{tpu_custom_call.1} parent=1 // loop_header
      %s12 = sphi 0, %s16
      %p13 = scmp.ge.s32.totalorder %s12, 4
      %s19 = sphi 0, %s31
      %s20 = sphi 0, %s27
      %s21 = sphi 0, %s19
      %s22 = sphi 0, %s20
      %s23 = sphi 0, %s21
      %s24 = sphi 0, %s22
      %s36 = sphi 0, %s38
      %s39 = sphi 0, %s36
      %s40 = sphi 0, %s39
      %s56 = sphi 0, %s40
      %s60 = sphi 0, %s60
      %s62 = sphi 0, %s60
      %s63 = sphi 0, %s62
      %s77 = sphi 0, %s63
      %s81 = sphi 0, %s81
      %s83 = sphi 0, %s81
      %s84 = sphi 0, %s83
      %s98 = sphi 0, %s84
      %s106 = sphi 0, %s108
      %s109 = sphi 0, %s106
      %s110 = sphi 0, %s109
      %s126 = sphi 0, %s110
    $region4: #{tpu_custom_call.1} parent=1 // loop_header_branch
      %15 = sbr.rel (%p13) target = $region8
    $region5: #{tpu_custom_call.1} parent=1 // loop_body
      %s17 = ssub.s32 %s12, 1
      %s18 = ssub.s32 %s12, 2
      %s25 = sadd.s32 1, %s20
      %p26 = scmp.ge.s32.totalorder %s25, 1
      %s27 = scalar_select %p26, 0, %s25
      %s28 = sadd.s32 1, %s19
      %s29 = scalar_select %p26, %s28, %s19
      %p30 = scmp.ge.s32.totalorder %s29, 2
      %s31 = scalar_select %p30, 0, %s29
      %s32 = ssub.s32 %s19, %s31
      %s33 = ssub.s32 %s20, %s27
      %s34 = sor.u32 %s32, %s33
      %p35 = scmp.eq.s32.totalorder %s34, 0
      %s37 = sadd.s32 %s36, 1
      %s38 = scalar_select %p35, %s36, %s37
      %p41 = pneg %p35
      %p42 = scmp.eq.s32.totalorder %s12, 1
      %p43 = por %p41, %p42
      %p44 = scmp.ne.s32.totalorder %s36, %s39
      %p45 = scmp.eq.s32.totalorder %s12, 0
      %p46 = por %p44, %p45
      %p47 = scmp.ne.s32.totalorder %s36, %s39
      %p48 = scmp.eq.s32.totalorder %s17, 1
      %p49 = por %p47, %p48
      %p50 = scmp.ne.s32.totalorder %s39, %s40
      %p51 = scmp.eq.s32.totalorder %s17, 0
      %p52 = por %p50, %p51
      %p53 = scmp.ne.s32.totalorder %s39, %s40
      %p54 = scmp.eq.s32.totalorder %s18, 1
      %p55 = por %p53, %p54
      %p57 = scmp.ne.s32.totalorder %s40, %s56
      %p58 = scmp.eq.s32.totalorder %s18, 0
      %p59 = por %p57, %p58
      %s61 = sadd.s32 %s60, 1
      %p64 = scmp.eq.s32.totalorder %s12, 1
      %p65 = scmp.ne.s32.totalorder %s60, %s62
      %p66 = scmp.eq.s32.totalorder %s12, 0
      %p67 = por %p65, %p66
      %p68 = scmp.ne.s32.totalorder %s60, %s62
      %p69 = scmp.eq.s32.totalorder %s17, 1
      %p70 = por %p68, %p69
      %p71 = scmp.ne.s32.totalorder %s62, %s63
      %p72 = scmp.eq.s32.totalorder %s17, 0
      %p73 = por %p71, %p72
      %p74 = scmp.ne.s32.totalorder %s62, %s63
      %p75 = scmp.eq.s32.totalorder %s18, 1
      %p76 = por %p74, %p75
      %p78 = scmp.ne.s32.totalorder %s63, %s77
      %p79 = scmp.eq.s32.totalorder %s18, 0
      %p80 = por %p78, %p79
      %s82 = sadd.s32 %s81, 1
      %p85 = scmp.eq.s32.totalorder %s12, 1
      %p86 = scmp.ne.s32.totalorder %s81, %s83
      %p87 = scmp.eq.s32.totalorder %s12, 0
      %p88 = por %p86, %p87
      %p89 = scmp.ne.s32.totalorder %s81, %s83
      %p90 = scmp.eq.s32.totalorder %s17, 1
      %p91 = por %p89, %p90
      %p92 = scmp.ne.s32.totalorder %s83, %s84
      %p93 = scmp.eq.s32.totalorder %s17, 0
      %p94 = por %p92, %p93
      %p95 = scmp.ne.s32.totalorder %s83, %s84
      %p96 = scmp.eq.s32.totalorder %s18, 1
      %p97 = por %p95, %p96
      %p99 = scmp.ne.s32.totalorder %s84, %s98
      %p100 = scmp.eq.s32.totalorder %s18, 0
      %p101 = por %p99, %p100
      %s102 = ssub.s32 %s19, %s31
      %s103 = ssub.s32 %s20, %s27
      %s104 = sor.u32 %s102, %s103
      %p105 = scmp.eq.s32.totalorder %s104, 0
      %s107 = sadd.s32 %s106, 1
      %s108 = scalar_select %p105, %s106, %s107
      %p111 = pneg %p105
      %p112 = scmp.eq.s32.totalorder %s12, 1
      %p113 = por %p111, %p112
      %p114 = scmp.ne.s32.totalorder %s106, %s109
      %p115 = scmp.eq.s32.totalorder %s12, 0
      %p116 = por %p114, %p115
      %p117 = scmp.ne.s32.totalorder %s106, %s109
      %p118 = scmp.eq.s32.totalorder %s17, 1
      %p119 = por %p117, %p118
      %p120 = scmp.ne.s32.totalorder %s109, %s110
      %p121 = scmp.eq.s32.totalorder %s17, 0
      %p122 = por %p120, %p121
      %p123 = scmp.ne.s32.totalorder %s109, %s110
      %p124 = scmp.eq.s32.totalorder %s18, 1
      %p125 = por %p123, %p124
      %p127 = scmp.ne.s32.totalorder %s110, %s126
      %p128 = scmp.eq.s32.totalorder %s18, 0
      %p129 = por %p127, %p128
      %p130 = scmp.le.s32.totalorder 1, %s12
      %p131 = scmp.lt.s32.totalorder %s12, 3
      %p132 = pnand %p130, %p131
      %p133 = pneg %p132
      // Predicated region
      $region9: #{tpu_custom_call.1} parent=5 // pred_check
        _
      $region10: #{tpu_custom_call.1} parent=5 // pred_check_branch
        %135 = sbr.rel (%p132) target = $region12
      $region11: #{tpu_custom_call.1} parent=5 // pred_region
        %s136 = ssub.s32 %s12, 1
        // Predicated region
        $region13: #{tpu_custom_call.1} parent=11 // pred_check
          %p137 = pneg %p73
        $region14: #{tpu_custom_call.1} parent=11 // pred_check_branch
          %139 = sbr.rel (%p137) target = $region16
        $region15: #{tpu_custom_call.1} parent=11 // pred_region
          _
        $region16: #{tpu_custom_call.1} parent=11 // pred_fallthru
          _
        // Predicated region
        $region17: #{tpu_custom_call.1} parent=11 // pred_check
          %p140 = pneg %p94
        $region18: #{tpu_custom_call.1} parent=11 // pred_check_branch
          %142 = sbr.rel (%p140) target = $region20
        $region19: #{tpu_custom_call.1} parent=11 // pred_region
          _
        $region20: #{tpu_custom_call.1} parent=11 // pred_fallthru
          _
      $region12: #{tpu_custom_call.1} parent=5 // pred_fallthru
        _
      %p143 = scmp.lt.s32.totalorder %s12, 2
      // Predicated region
      $region21: #{tpu_custom_call.1} parent=5 // pred_check
        %p144 = pneg %p143
      $region22: #{tpu_custom_call.1} parent=5 // pred_check_branch
        %146 = sbr.rel (%p144) target = $region24
      $region23: #{tpu_custom_call.1} parent=5 // pred_region
        // Predicated region
        $region25: #{tpu_custom_call.1} parent=23 // pred_check
          %p147 = pneg %p46
        $region26: #{tpu_custom_call.1} parent=23 // pred_check_branch
          %149 = sbr.rel (%p147) target = $region28
        $region27: #{tpu_custom_call.1} parent=23 // pred_region
          %p150 = scmp.lt.s32.totalorder %s19, 1
          %s151 = scalar_select %p150, %s19, 1
          %p152 = scmp.lt.s32.totalorder %s20, 0
          %s153 = scalar_select %p152, %s20, 0
          %s154 = sadd.s32 %s153, %s151
          %s155 = smul.addr %s154, 4
          %s156 = scalar_lea.vmem %s0, %s155
        $region28: #{tpu_custom_call.1} parent=23 // pred_fallthru
          _
      $region24: #{tpu_custom_call.1} parent=5 // pred_fallthru
        _
      %p157 = scmp.le.s32.totalorder 1, %s12
      %p158 = scmp.lt.s32.totalorder %s12, 3
      %p159 = pnand %p157, %p158
      %p160 = pneg %p159
      // Predicated region
      $region29: #{tpu_custom_call.1} parent=5 // pred_check
        _
      $region30: #{tpu_custom_call.1} parent=5 // pred_check_branch
        %162 = sbr.rel (%p159) target = $region32
      $region31: #{tpu_custom_call.1} parent=5 // pred_region
        %s163 = ssub.s32 %s12, 1
        %p164 = scmp.lt.s32.totalorder %s21, 1
        %s165 = scalar_select %p164, %s21, 1
        %p166 = scmp.lt.s32.totalorder %s22, 0
        %s167 = scalar_select %p166, %s22, 0
        %s168 = sadd.s32 %s167, %s165
        %s169 = smul.addr %s168, 4
        %s170 = scalar_lea.vmem %s0, %s169
        %p171 = pneg %p52
        %p172 = pneg %p49
        %p173 = pneg %p73
        %p174 = pneg %p70
        %p175 = pneg %p94
        %p176 = pneg %p91
        %p177 = pneg %p122
        %p178 = pneg %p119
        %s179 = sand.u32 %s109, 1
        %s180 = scalar_lea.sflag [#allocation3], %s179
        %s181 = sand.u32 %s109, 1
        %s182 = smul.addr %s181, 4
        %s183 = scalar_lea.vmem [#allocation2], %s182
        %p184 = scmp.lt.s32.totalorder %s21, 1
        %s185 = scalar_select %p184, %s21, 1
        %p186 = scmp.lt.s32.totalorder %s22, 0
        %s187 = scalar_select %p186, %s22, 0
        %s188 = sadd.s32 %s187, %s185
        %s189 = smul.addr %s188, 4
        %s190 = scalar_lea.vmem %s0, %s189
        %v191 = vld [vmem:[%s190] sm:$0xf]
        %vm192 = vcmask 125952
        %v193 = vsel %vm192, %v191, 0.0
        %v194 = vrot.slane %v193, 4
        %v195 = vadd.f32 %v193, %v194
        %v196 = vrot.slane %v195, 2
        %v197 = vadd.f32 %v195, %v196
        %v198 = vrot.slane %v197, 1
        %v199 = vadd.f32 %v197, %v198
        %v200 = vmul.f32 %v191, %v191
        %v201 = vsel %vm192, %v200, 0.0
        %v202 = vrot.slane %v201, 4
        %v203 = vadd.f32 %v201, %v202
        %v204 = vrot.slane %v203, 2
        %v205 = vadd.f32 %v203, %v204
        %v206 = vrot.slane %v205, 1
        %v207 = vadd.f32 %v205, %v206
        %v208 = vmul.f32 %v199, 0.25
        %v209 = vmul.f32 %v207, 0.25
        %v210 = vmul.f32 %v208, %v208
        %v211 = vsub.f32 %v209, %v210
        %v212 = vadd.f32 %v211, 0.0001
        %v213 = vrsqrt.pop %v212
        %v214 = vmul.f32 %v213, %v212
        %v215 = vmul.f32 %v214, %v213
        %v216 = vmul.f32 0.5, %v215
        %v217 = vsub.f32 1.5, %v216
        %v218 = vmul.f32 %v213, %v217
        %vm219 = vweird.f32 %v212
        %vm220 = vweird.f32 %v213
        %vm221 = vmor %vm219, %vm220
        %v222 = vsel %vm221, %v213, %v218
        %v223 = vld [vmem:[%s1] sm:$0xf]
        %225 = vset.pattern.permute.xlu0 0
        %226 = vperm.xlu0 %225, %v223
        %v227 = vpop.permute.xlu0 %226
        %v229 = vmul.f32 %v227, %v222
        %v230 = vld [vmem:[%s2] sm:$0xf]
        %v231 = vmul.f32 %v208, %v229
        %233 = vset.pattern.permute.xlu0 0
        %234 = vperm.xlu0 %233, %v230
        %v235 = vpop.permute.xlu0 %234
        %v237 = vsub.f32 %v235, %v231
        %v238 = vmul.f32 %v191, %v229
        %v239 = vadd.f32 %v238, %v237
        %240 = vst.msk [vmem:[%s183] sm:$0xf] %vm192, %v239
        %s241 = sand.u32 %s109, 1
        %s242 = scalar_lea.sflag [#allocation3], %s241
        %s243 = sand.u32 %s109, 1
        %s244 = smul.addr %s243, 4
        %s245 = scalar_lea.vmem [#allocation2], %s244
        // Predicated region
        $region33: #{tpu_custom_call.1} parent=31 // pred_check
          %p246 = pneg %p119
        $region34: #{tpu_custom_call.1} parent=31 // pred_check_branch
          %248 = sbr.rel (%p246) target = $region36
        $region35: #{tpu_custom_call.1} parent=31 // pred_region
          %250 = vsyncadd %s242, 0
          %s251 = sadd.s32 %s22, %s21
          %s252 = smul.addr %s251, 4
          %s253 = scalar_lea.hbm %s3, %s252
          %s255 = sshll.u32 %s245, 4
          %s256 = int_to_ptr.vmem [resolvable:$true] %s255
          %s257 = sshll.u32 %s253, 4
          %s258 = int_to_ptr.hbm [resolvable:$true] %s257
          %260 = dma.vmem_to_hbm [thread:$0]  %s256, 64, %s258, %s242
        $region36: #{tpu_custom_call.1} parent=31 // pred_fallthru
          _
      $region32: #{tpu_custom_call.1} parent=5 // pred_fallthru
        _
      %p261 = scmp.le.s32.totalorder 2, %s12
      // Predicated region
      $region37: #{tpu_custom_call.1} parent=5 // pred_check
        %p262 = pneg %p261
      $region38: #{tpu_custom_call.1} parent=5 // pred_check_branch
        %264 = sbr.rel (%p262) target = $region40
      $region39: #{tpu_custom_call.1} parent=5 // pred_region
        %s265 = ssub.s32 %s12, 2
        // Predicated region
        $region41: #{tpu_custom_call.1} parent=39 // pred_check
          %p266 = pneg %p125
        $region42: #{tpu_custom_call.1} parent=39 // pred_check_branch
          %268 = sbr.rel (%p266) target = $region44
        $region43: #{tpu_custom_call.1} parent=39 // pred_region
          %s269 = sand.u32 %s110, 1
          %s270 = scalar_lea.sflag [#allocation3], %s269
          %s271 = sand.u32 %s110, 1
          %s272 = smul.addr %s271, 4
          %s273 = scalar_lea.vmem [#allocation2], %s272
          %275 = dma.done %s270, 64
        $region44: #{tpu_custom_call.1} parent=39 // pred_fallthru
          _
      $region40: #{tpu_custom_call.1} parent=5 // pred_fallthru
        _
    $region6: #{tpu_custom_call.1} parent=1 // loop_footer
      %s16 = sadd.s32 1, %s12
    $region7: #{tpu_custom_call.1} parent=1 // loop_footer_branch
      %11 = sbr.rel target = $region3
    $region8: #{tpu_custom_call.1} parent=1 // loop_exit
      _
    %276 = vsyncpa [#allocation3], 1
    %s277 = scalar_lea.sflag [#allocation3], 1
    %278 = vsyncpa %s277, 1

</llo_original>
